<compile_context>
chip_gen: v6e
topology: v6e:2x2x1
jax: 0.10.0
libtpu: 0.0.40
codegen_flags: <defaults>
</compile_context>

<pallas_src>
import math

import jax
import jax.numpy as jnp
from jax.experimental import pallas as pl
from jax.experimental.pallas import tpu as pltpu


# ---------------------------------------------------------------------------
# Fused decoder kernel: deconv1 -> LeakyReLU -> deconv2 -> LeakyReLU -> Linear
# ---------------------------------------------------------------------------
def decoder_kernel(x_ref, w1_ref, b1_ref, w2_ref, b2_ref, wl_ref, bl_ref, out_ref):
    # x_ref : (1, T, Cin)          one batch element
    # w1_ref: (3*Cin, 2*H)   bf16  packed ConvTranspose1d #1
    # w2_ref: (3*H, 2*Cout)  bf16  packed ConvTranspose1d #2
    # wl_ref: (4*Cout, 4*Cout) bf16  block-diag Linear
    # out_ref: (1, T, 4*Cout) f32  packed output (wrapper reshapes to (B, 4T, Cout))
    T = x_ref.shape[1]
    H = w2_ref.shape[0] // 3

    x = x_ref[0].astype(jnp.float32)                      # (T, Cin)

    def leaky(v):
        return jnp.where(v > 0, v, 0.2 * v)

    def shift_up(v):      # row t <- v[t-1], zero at t=0   (previous timestep)
        pad = jnp.zeros((1, v.shape[1]), v.dtype)
        return jnp.concatenate([pad, v[:-1, :]], axis=0)

    def shift_down(v):    # row t <- v[t+1], zero at t=T-1 (next timestep)
        pad = jnp.zeros((1, v.shape[1]), v.dtype)
        return jnp.concatenate([v[1:, :], pad], axis=0)

    # ---- ConvTranspose1d #1 (Cin -> H, k=4, s=2, p=1) as a single matmul ----
    a1 = jnp.concatenate([shift_up(x), x, shift_down(x)], axis=-1)        # (T, 3Cin)
    h1 = jnp.dot(a1.astype(jnp.bfloat16), w1_ref[...],
                 preferred_element_type=jnp.float32) + b1_ref[...]        # (T, 2H)
    h1 = leaky(h1)
    e = h1[:, :H]          # y[2t]     (even timesteps of the length-2T sequence)
    o = h1[:, H:]          # y[2t+1]   (odd timesteps)

    # ---- ConvTranspose1d #2 (H -> Cout, k=4, s=2, p=1) --------------------
    # For layer-2 input index u = 2t  : (prev, cur, next) = (o[t-1], e[t], o[t])
    # For layer-2 input index u = 2t+1: (prev, cur, next) = (e[t],   o[t], e[t+1])
    aug_e = jnp.concatenate([shift_up(o), e, o], axis=-1)                 # (T, 3H)
    aug_o = jnp.concatenate([e, o, shift_down(e)], axis=-1)               # (T, 3H)
    aug = jnp.concatenate([aug_e, aug_o], axis=0)                         # (2T, 3H)
    z = jnp.dot(aug.astype(jnp.bfloat16), w2_ref[...],
                preferred_element_type=jnp.float32) + b2_ref[...]         # (2T, 2Cout)
    z = leaky(z)
    # Row t of h2 packs final timesteps [4t, 4t+1, 4t+2, 4t+3] on the lane axis.
    h2 = jnp.concatenate([z[:T, :], z[T:, :]], axis=-1)                   # (T, 4Cout)

    # ---- Linear(Cout -> Cout) applied per timestep via block-diag weight ---
    out = jnp.dot(h2.astype(jnp.bfloat16), wl_ref[...],
                  preferred_element_type=jnp.float32) + bl_ref[...]       # (T, 4Cout)
    out_ref[0] = out.astype(out_ref.dtype)


# ---------------------------------------------------------------------------
# Parameter construction (torch layouts) and packing for the kernel
# ---------------------------------------------------------------------------
def make_raw_params(key, input_size, hidden_size, output_size):
    k1, k2, k3, k4, k5, k6 = jax.random.split(key, 6)

    def xavier(k, shape, fan_in, fan_out):
        std = math.sqrt(2.0 / (fan_in + fan_out))
        return (std * jax.random.normal(k, shape)).astype(jnp.float32)

    K = 4
    # NOTE: init_weight() zeroes biases; small nonzero biases are used here so the
    # bias code path of the kernel is actually exercised (semantics unchanged).
    return {
        # torch ConvTranspose1d weight layout: (in_channels, out_channels, K)
        "deconv1_w": xavier(k1, (input_size, hidden_size, K),
                            fan_in=hidden_size * K, fan_out=input_size * K),
        "deconv1_b": 0.01 * jax.random.normal(k4, (hidden_size,), jnp.float32),
        "deconv2_w": xavier(k2, (hidden_size, output_size, K),
                            fan_in=output_size * K, fan_out=hidden_size * K),
        "deconv2_b": 0.01 * jax.random.normal(k5, (output_size,), jnp.float32),
        # torch Linear layout: (out_features, in_features)
        "lin_w": xavier(k3, (output_size, output_size),
                        fan_in=output_size, fan_out=output_size),
        "lin_b": 0.01 * jax.random.normal(k6, (output_size,), jnp.float32),
    }


def _pack_deconv(w, b):
    """Pack torch ConvTranspose1d(k=4, s=2, p=1) weights into (3*Cin, 2*Cout).

    Augmented input row is [x[m-1] | x[m] | x[m+1]]; output column blocks are
    [out[2m] | out[2m+1]].
    """
    cin, cout, k = w.shape
    assert k == 4
    z = jnp.zeros((cin, cout), w.dtype)
    rows_prev = jnp.concatenate([w[:, :, 3], z], axis=1)          # x[m-1] taps
    rows_cur = jnp.concatenate([w[:, :, 1], w[:, :, 2]], axis=1)  # x[m]   taps
    rows_next = jnp.concatenate([z, w[:, :, 0]], axis=1)          # x[m+1] taps
    w_aug = jnp.concatenate([rows_prev, rows_cur, rows_next], axis=0)  # (3Cin, 2Cout)
    b_aug = jnp.concatenate([b, b]).reshape(1, 2 * cout)
    return w_aug, b_aug


def pack_params(raw):
    w1, b1 = _pack_deconv(raw["deconv1_w"], raw["deconv1_b"])
    w2, b2 = _pack_deconv(raw["deconv2_w"], raw["deconv2_b"])
    cout = raw["lin_w"].shape[0]
    # Block-diagonal Linear weight acting on the 4-way time-packed lane layout.
    wl = jnp.kron(jnp.eye(4, dtype=jnp.float32), raw["lin_w"].T)   # (4Cout, 4Cout)
    bl = jnp.tile(raw["lin_b"], 4).reshape(1, 4 * cout)
    return {
        "w1": w1.astype(jnp.bfloat16), "b1": b1.astype(jnp.float32),
        "w2": w2.astype(jnp.bfloat16), "b2": b2.astype(jnp.float32),
        "wl": wl.astype(jnp.bfloat16), "bl": bl.astype(jnp.float32),
    }


# ---------------------------------------------------------------------------
# Forward pass (single fused pallas_call, grid over batch)
# ---------------------------------------------------------------------------
def movement_conv_decoder_forward(p, inputs):
    B, T, cin = inputs.shape
    two_h = p["w1"].shape[1]
    hidden = two_h // 2
    four_cout = p["wl"].shape[1]
    cout = four_cout // 4

    flops = 2 * B * (T * (3 * cin) * two_h
                     + (2 * T) * (3 * hidden) * (2 * cout)
                     + T * four_cout * four_cout)
    bytes_accessed = (inputs.size * 4 + B * T * four_cout * 4
                      + sum(int(p[k].size) * p[k].dtype.itemsize for k in p))

    out_packed = pl.pallas_call(
        decoder_kernel,
        grid=(B,),
        out_shape=jax.ShapeDtypeStruct((B, T, four_cout), jnp.float32),
        in_specs=[
            pl.BlockSpec((1, T, cin), lambda b: (b, 0, 0)),
            pl.BlockSpec(p["w1"].shape, lambda b: (0, 0)),
            pl.BlockSpec(p["b1"].shape, lambda b: (0, 0)),
            pl.BlockSpec(p["w2"].shape, lambda b: (0, 0)),
            pl.BlockSpec(p["b2"].shape, lambda b: (0, 0)),
            pl.BlockSpec(p["wl"].shape, lambda b: (0, 0)),
            pl.BlockSpec(p["bl"].shape, lambda b: (0, 0)),
        ],
        out_specs=pl.BlockSpec((1, T, four_cout), lambda b: (b, 0, 0)),
        compiler_params=pltpu.CompilerParams(
            dimension_semantics=("parallel",)),
        cost_estimate=pl.CostEstimate(flops=flops, transcendentals=0,
                                      bytes_accessed=bytes_accessed),
    )(inputs.astype(jnp.float32),
      p["w1"], p["b1"], p["w2"], p["b2"], p["wl"], p["bl"])

    # (B, T, 4*Cout) -> (B, 4T, Cout): contiguous, free reshape in the wrapper.
    return out_packed.reshape(B, 4 * T, cout)


# ---------------------------------------------------------------------------
# Pure-JAX reference (direct torch ConvTranspose1d semantics) for validation
# ---------------------------------------------------------------------------
def reference_forward(raw, inputs):
    def leaky(v):
        return jnp.where(v > 0, v, 0.2 * v)

    def deconv_k4s2p1(x, w, b):   # x: (B, L, Cin), w: (Cin, Cout, 4), b: (Cout,)
        B, L, _ = x.shape
        cout = w.shape[1]
        y = jnp.zeros((B, 2 * L + 2, cout), jnp.float32)
        for i in range(L):
            for k in range(4):
                y = y.at[:, 2 * i + k, :].add(x[:, i, :] @ w[:, :, k])
        return y[:, 1:2 * L + 1, :] + b          # trim padding=1 from both ends

    h = leaky(deconv_k4s2p1(inputs.astype(jnp.float32),
                            raw["deconv1_w"], raw["deconv1_b"]))
    h = leaky(deconv_k4s2p1(h, raw["deconv2_w"], raw["deconv2_b"]))
    return h @ raw["lin_w"].T + raw["lin_b"]


if __name__ == "__main__":
    B, T = 2, 8
    input_size, hidden_size, output_size = 16, 32, 32

    key = jax.random.PRNGKey(0)
    k_param, k_in = jax.random.split(key)

    raw = make_raw_params(k_param, input_size, hidden_size, output_size)
    packed = pack_params(raw)

    inputs = jax.random.normal(k_in, (B, T, input_size), jnp.float32)

    out = movement_conv_decoder_forward(packed, inputs)
    jax.block_until_ready(out)
    assert out.shape == (B, 4 * T, output_size)

    ref = reference_forward(raw, inputs)
    max_err = float(jnp.max(jnp.abs(out - ref)))
    assert max_err < 1e-1, f"kernel mismatch vs reference: max abs err {max_err}"
    print("KERNEL_OK")
</pallas_src>

<mosaic_0001>
module attributes {stable_mosaic.version = 11 : i64} {
  func.func @decoder_kernel(%arg0: i32, %arg1: memref<1x8x16xf32, #tpu.memory_space<vmem>>, %arg2: memref<48x64xbf16, #tpu.memory_space<vmem>>, %arg3: memref<1x64xf32, #tpu.memory_space<vmem>>, %arg4: memref<96x64xbf16, #tpu.memory_space<vmem>>, %arg5: memref<1x64xf32, #tpu.memory_space<vmem>>, %arg6: memref<128x128xbf16, #tpu.memory_space<vmem>>, %arg7: memref<1x128xf32, #tpu.memory_space<vmem>>, %arg8: memref<1x8x128xf32, #tpu.memory_space<vmem>>) attributes {dimension_semantics = [#tpu.dimension_semantics<parallel>], iteration_bounds = array<i64: 2>, scalar_prefetch = 0 : i64, scratch_operands = 0 : i64, tpu.core_type = #tpu.core_type<tc>, window_params = [{transform_indices = @transform_0, window_bounds = array<i64: 1, 8, 16>}, {pipeline_mode = #tpu.pipeline_mode<synchronous>, transform_indices = @transform_1, window_bounds = array<i64: 48, 64>}, {pipeline_mode = #tpu.pipeline_mode<synchronous>, transform_indices = @transform_2, window_bounds = array<i64: 1, 64>}, {pipeline_mode = #tpu.pipeline_mode<synchronous>, transform_indices = @transform_3, window_bounds = array<i64: 96, 64>}, {pipeline_mode = #tpu.pipeline_mode<synchronous>, transform_indices = @transform_4, window_bounds = array<i64: 1, 64>}, {pipeline_mode = #tpu.pipeline_mode<synchronous>, transform_indices = @transform_5, window_bounds = array<i64: 128, 128>}, {pipeline_mode = #tpu.pipeline_mode<synchronous>, transform_indices = @transform_6, window_bounds = array<i64: 1, 128>}, {transform_indices = @transform_7, window_bounds = array<i64: 1, 8, 128>}]} {
    %c0 = arith.constant 0 : index
    %c0_0 = arith.constant 0 : index
    %c0_1 = arith.constant 0 : index
    %0 = vector.load %arg1[%c0, %c0_0, %c0_1] : memref<1x8x16xf32, #tpu.memory_space<vmem>>, vector<1x8x16xf32>
    %1 = vector.shape_cast %0 : vector<1x8x16xf32> to vector<8x16xf32>
    %cst = arith.constant 0.000000e+00 : f32
    %2 = vector.broadcast %cst : f32 to vector<1x16xf32>
    %3 = vector.extract_strided_slice %1 {offsets = [0, 0], sizes = [7, 16], strides = [1, 1]} : vector<8x16xf32> to vector<7x16xf32>
    %4 = tpu.concatenate %2, %3 in 0 : vector<1x16xf32>, vector<7x16xf32> -> vector<8x16xf32>
    %cst_2 = arith.constant 0.000000e+00 : f32
    %5 = vector.broadcast %cst_2 : f32 to vector<1x16xf32>
    %6 = vector.extract_strided_slice %1 {offsets = [1, 0], sizes = [7, 16], strides = [1, 1]} : vector<8x16xf32> to vector<7x16xf32>
    %7 = tpu.concatenate %6, %5 in 0 : vector<7x16xf32>, vector<1x16xf32> -> vector<8x16xf32>
    %8 = tpu.concatenate %4, %1, %7 in 1 : vector<8x16xf32>, vector<8x16xf32>, vector<8x16xf32> -> vector<8x48xf32>
    %9 = arith.truncf %8 : vector<8x48xf32> to vector<8x48xbf16>
    %c0_3 = arith.constant 0 : index
    %c0_4 = arith.constant 0 : index
    %10 = vector.load %arg2[%c0_3, %c0_4] : memref<48x64xbf16, #tpu.memory_space<vmem>>, vector<48x64xbf16>
    %cst_5 = arith.constant dense<0.000000e+00> : vector<8x64xf32>
    %11 = tpu.matmul %9, %10, %cst_5 {dimension_numbers = #tpu.dot_dimension_numbers<[1], [0], [0], [1], [0, 0, 1, 1], [], []>} : vector<8x48xbf16>, vector<48x64xbf16>, vector<8x64xf32> -> vector<8x64xf32>
    %c0_6 = arith.constant 0 : index
    %c0_7 = arith.constant 0 : index
    %12 = vector.load %arg3[%c0_6, %c0_7] : memref<1x64xf32, #tpu.memory_space<vmem>>, vector<1x64xf32>
    %13 = vector.broadcast %12 : vector<1x64xf32> to vector<8x64xf32>
    %14 = arith.addf %11, %13 : vector<8x64xf32>
    %cst_8 = arith.constant 0.000000e+00 : f32
    %15 = vector.broadcast %cst_8 : f32 to vector<8x64xf32>
    %16 = arith.cmpf ogt, %14, %15 : vector<8x64xf32>
    %cst_9 = arith.constant 2.000000e-01 : f32
    %17 = vector.broadcast %cst_9 : f32 to vector<8x64xf32>
    %18 = arith.mulf %17, %14 : vector<8x64xf32>
    %19 = arith.select %16, %14, %18 : vector<8x64xi1>, vector<8x64xf32>
    %20 = vector.extract_strided_slice %19 {offsets = [0, 0], sizes = [8, 32], strides = [1, 1]} : vector<8x64xf32> to vector<8x32xf32>
    %21 = vector.extract_strided_slice %19 {offsets = [0, 32], sizes = [8, 32], strides = [1, 1]} : vector<8x64xf32> to vector<8x32xf32>
    %cst_10 = arith.constant 0.000000e+00 : f32
    %22 = vector.broadcast %cst_10 : f32 to vector<1x32xf32>
    %23 = vector.extract_strided_slice %21 {offsets = [0, 0], sizes = [7, 32], strides = [1, 1]} : vector<8x32xf32> to vector<7x32xf32>
    %24 = tpu.concatenate %22, %23 in 0 : vector<1x32xf32>, vector<7x32xf32> -> vector<8x32xf32>
    %25 = tpu.concatenate %24, %20, %21 in 1 : vector<8x32xf32>, vector<8x32xf32>, vector<8x32xf32> -> vector<8x96xf32>
    %cst_11 = arith.constant 0.000000e+00 : f32
    %26 = vector.broadcast %cst_11 : f32 to vector<1x32xf32>
    %27 = vector.extract_strided_slice %20 {offsets = [1, 0], sizes = [7, 32], strides = [1, 1]} : vector<8x32xf32> to vector<7x32xf32>
    %28 = tpu.concatenate %27, %26 in 0 : vector<7x32xf32>, vector<1x32xf32> -> vector<8x32xf32>
    %29 = tpu.concatenate %20, %21, %28 in 1 : vector<8x32xf32>, vector<8x32xf32>, vector<8x32xf32> -> vector<8x96xf32>
    %30 = tpu.concatenate %25, %29 in 0 : vector<8x96xf32>, vector<8x96xf32> -> vector<16x96xf32>
    %31 = arith.truncf %30 : vector<16x96xf32> to vector<16x96xbf16>
    %c0_12 = arith.constant 0 : index
    %c0_13 = arith.constant 0 : index
    %32 = vector.load %arg4[%c0_12, %c0_13] : memref<96x64xbf16, #tpu.memory_space<vmem>>, vector<96x64xbf16>
    %cst_14 = arith.constant dense<0.000000e+00> : vector<16x64xf32>
    %33 = tpu.matmul %31, %32, %cst_14 {dimension_numbers = #tpu.dot_dimension_numbers<[1], [0], [0], [1], [0, 0, 1, 1], [], []>} : vector<16x96xbf16>, vector<96x64xbf16>, vector<16x64xf32> -> vector<16x64xf32>
    %c0_15 = arith.constant 0 : index
    %c0_16 = arith.constant 0 : index
    %34 = vector.load %arg5[%c0_15, %c0_16] : memref<1x64xf32, #tpu.memory_space<vmem>>, vector<1x64xf32>
    %35 = vector.broadcast %34 : vector<1x64xf32> to vector<16x64xf32>
    %36 = arith.addf %33, %35 : vector<16x64xf32>
    %cst_17 = arith.constant 0.000000e+00 : f32
    %37 = vector.broadcast %cst_17 : f32 to vector<16x64xf32>
    %38 = arith.cmpf ogt, %36, %37 : vector<16x64xf32>
    %cst_18 = arith.constant 2.000000e-01 : f32
    %39 = vector.broadcast %cst_18 : f32 to vector<16x64xf32>
    %40 = arith.mulf %39, %36 : vector<16x64xf32>
    %41 = arith.select %38, %36, %40 : vector<16x64xi1>, vector<16x64xf32>
    %42 = vector.extract_strided_slice %41 {offsets = [0, 0], sizes = [8, 64], strides = [1, 1]} : vector<16x64xf32> to vector<8x64xf32>
    %43 = vector.extract_strided_slice %41 {offsets = [8, 0], sizes = [8, 64], strides = [1, 1]} : vector<16x64xf32> to vector<8x64xf32>
    %44 = tpu.concatenate %42, %43 in 1 : vector<8x64xf32>, vector<8x64xf32> -> vector<8x128xf32>
    %45 = arith.truncf %44 : vector<8x128xf32> to vector<8x128xbf16>
    %c0_19 = arith.constant 0 : index
    %c0_20 = arith.constant 0 : index
    %46 = vector.load %arg6[%c0_19, %c0_20] : memref<128x128xbf16, #tpu.memory_space<vmem>>, vector<128x128xbf16>
    %cst_21 = arith.constant dense<0.000000e+00> : vector<8x128xf32>
    %47 = tpu.matmul %45, %46, %cst_21 {dimension_numbers = #tpu.dot_dimension_numbers<[1], [0], [0], [1], [0, 0, 1, 1], [], []>} : vector<8x128xbf16>, vector<128x128xbf16>, vector<8x128xf32> -> vector<8x128xf32>
    %c0_22 = arith.constant 0 : index
    %c0_23 = arith.constant 0 : index
    %48 = vector.load %arg7[%c0_22, %c0_23] : memref<1x128xf32, #tpu.memory_space<vmem>>, vector<1x128xf32>
    %49 = vector.broadcast %48 : vector<1x128xf32> to vector<8x128xf32>
    %50 = arith.addf %47, %49 : vector<8x128xf32>
    %c0_24 = arith.constant 0 : index
    %c0_25 = arith.constant 0 : index
    %c0_26 = arith.constant 0 : index
    %51 = vector.load %arg8[%c0_24, %c0_25, %c0_26] : memref<1x8x128xf32, #tpu.memory_space<vmem>>, vector<1x8x128xf32>
    %52 = vector.shape_cast %51 : vector<1x8x128xf32> to vector<8x128xf32>
    %53 = vector.shape_cast %50 : vector<8x128xf32> to vector<1x8x128xf32>
    tpu.vector_store %arg8[%c0_24, %c0_25, %c0_26], %53 {strides = array<i32>} : memref<1x8x128xf32, #tpu.memory_space<vmem>>, vector<1x8x128xf32>,
    return
  }
  func.func @transform_0(%arg0: i32) -> (i32, i32, i32) {
    %c0_i32 = arith.constant 0 : i32
    %c0_i32_0 = arith.constant 0 : i32
    %c0_i32_1 = arith.constant 0 : i32
    return %arg0, %c0_i32, %c0_i32_0 : i32, i32, i32
  }
  func.func @transform_1(%arg0: i32) -> (i32, i32) {
    %c0_i32 = arith.constant 0 : i32
    %c0_i32_0 = arith.constant 0 : i32
    %c0_i32_1 = arith.constant 0 : i32
    return %c0_i32, %c0_i32_0 : i32, i32
  }
  func.func @transform_2(%arg0: i32) -> (i32, i32) {
    %c0_i32 = arith.constant 0 : i32
    %c0_i32_0 = arith.constant 0 : i32
    %c0_i32_1 = arith.constant 0 : i32
    return %c0_i32, %c0_i32_0 : i32, i32
  }
  func.func @transform_3(%arg0: i32) -> (i32, i32) {
    %c0_i32 = arith.constant 0 : i32
    %c0_i32_0 = arith.constant 0 : i32
    %c0_i32_1 = arith.constant 0 : i32
    return %c0_i32, %c0_i32_0 : i32, i32
  }
  func.func @transform_4(%arg0: i32) -> (i32, i32) {
    %c0_i32 = arith.constant 0 : i32
    %c0_i32_0 = arith.constant 0 : i32
    %c0_i32_1 = arith.constant 0 : i32
    return %c0_i32, %c0_i32_0 : i32, i32
  }
  func.func @transform_5(%arg0: i32) -> (i32, i32) {
    %c0_i32 = arith.constant 0 : i32
    %c0_i32_0 = arith.constant 0 : i32
    %c0_i32_1 = arith.constant 0 : i32
    return %c0_i32, %c0_i32_0 : i32, i32
  }
  func.func @transform_6(%arg0: i32) -> (i32, i32) {
    %c0_i32 = arith.constant 0 : i32
    %c0_i32_0 = arith.constant 0 : i32
    %c0_i32_1 = arith.constant 0 : i32
    return %c0_i32, %c0_i32_0 : i32, i32
  }
  func.func @transform_7(%arg0: i32) -> (i32, i32, i32) {
    %c0_i32 = arith.constant 0 : i32
    %c0_i32_0 = arith.constant 0 : i32
    %c0_i32_1 = arith.constant 0 : i32
    return %arg0, %c0_i32, %c0_i32_0 : i32, i32, i32
  }
}

</mosaic_0001>

<llo_original>
// kernel: tpu_custom_call.1
$region0: #{tpu_custom_call.1}
  #allocation0 [shape = 'u32[]', space=smem, size = 0x4, offset = 0x4, fixed_abs, tag = 'smem constant byte address 0x4 - core index']
  #allocation1 [shape = 'u32[144,128]{1,0:T(1,128)}', space=vmem, size = 0x12000, scoped, tag = 'internal scratch']
  %s0 = inlined_call_operand.hbm [shape: f32[2,8,16], index: 0, kind: input, shape index: {}]
  %s1 = inlined_call_operand.vmem [shape: bf16[48,64], index: 1, kind: input, shape index: {}]
  %s2 = inlined_call_operand.vmem [shape: f32[1,64], index: 2, kind: input, shape index: {}]
  %s3 = inlined_call_operand.vmem [shape: bf16[96,64], index: 3, kind: input, shape index: {}]
  %s4 = inlined_call_operand.hbm [shape: f32[1,64], index: 4, kind: input, shape index: {}]
  %s5 = inlined_call_operand.vmem [shape: bf16[128,128], index: 5, kind: input, shape index: {}]
  %s6 = inlined_call_operand.vmem [shape: f32[1,128], index: 6, kind: input, shape index: {}]
  %s7 = inlined_call_operand.hbm [shape: f32[2,8,128], index: 7, kind: output, shape index: {}]
  %s8 = sld [smem:[#allocation0]]
  $region69: #{tpu_custom_call.1} parent=0
    _
  %s10 = ssub.s32 1, %s8
  %s11 = scalar_select 0, %s10, %s8
  $region1: #{tpu_custom_call.1} parent=0
    #allocation2 [shape = 'u8[8192]{0}', space=vmem, size = 0x2000, scoped, tag = 'input window, operand 0']
    #allocation3 [shape = 's32[2]{0}', space=sflag, size = 0x8, scoped, tag = 'scoped memory for tpu_custom_call.1']
    #allocation4 [shape = 's32[2]{0}', space=sflag, size = 0x8, scoped, tag = 'scoped memory for tpu_custom_call.1']
    #allocation5 [shape = 'u8[512]{0}', space=vmem, size = 0x400, scoped, tag = 'input window, operand 4, single buffered']
    #allocation6 [shape = 's32[1]{0}', space=sflag, size = 0x4, scoped, tag = 'scoped memory for tpu_custom_call.1']
    #allocation7 [shape = 'u8[8192]{0}', space=vmem, size = 0x2000, scoped, tag = 'output window, operand 0']
    %12 = vsyncpa [#allocation3], 0
    %s13 = scalar_lea.sflag [#allocation3], 1
    %14 = vsyncpa %s13, 0
    %15 = vsyncpa [#allocation6], 0
    %16 = vsyncpa [#allocation4], 0
    %s17 = scalar_lea.sflag [#allocation4], 1
    %18 = vsyncpa %s17, 0
    loop: start=0, step=1, limit=4
    $region2: #{tpu_custom_call.1} parent=1 // loop_pre_header
      _
    $region3: #{tpu_custom_call.1} parent=1 // loop_header
      %s20 = sphi 0, %s24
      %p21 = scmp.ge.s32.totalorder %s20, 4
      %s30 = sphi 0, %s32
      %s33 = sphi 0, %s30
      %s34 = sphi 0, %s33
      %s50 = sphi 0, %s34
      %s54 = sphi 0, %s54
      %s56 = sphi 0, %s54
      %s57 = sphi 0, %s56
      %s71 = sphi 0, %s57
      %s75 = sphi 0, %s75
      %s77 = sphi 0, %s75
      %s78 = sphi 0, %s77
      %s92 = sphi 0, %s78
      %s96 = sphi 0, %s96
      %s98 = sphi 0, %s96
      %s99 = sphi 0, %s98
      %s113 = sphi 0, %s99
      %s117 = sphi 0, %s117
      %s119 = sphi 0, %s117
      %s120 = sphi 0, %s119
      %s134 = sphi 0, %s120
      %s138 = sphi 0, %s138
      %s140 = sphi 0, %s138
      %s141 = sphi 0, %s140
      %s155 = sphi 0, %s141
      %s159 = sphi 0, %s159
      %s161 = sphi 0, %s159
      %s162 = sphi 0, %s161
      %s176 = sphi 0, %s162
      %s182 = sphi 0, %s184
      %s185 = sphi 0, %s182
      %s186 = sphi 0, %s185
      %s202 = sphi 0, %s186
    $region4: #{tpu_custom_call.1} parent=1 // loop_header_branch
      %23 = sbr.rel (%p21) target = $region8
    $region5: #{tpu_custom_call.1} parent=1 // loop_body
      %s25 = ssub.s32 %s20, 1
      %s26 = ssub.s32 %s20, 2
      %s27 = sadd.s32 %s20, 1
      %s28 = ssub.s32 %s20, %s27
      %p29 = scmp.eq.s32.totalorder %s28, 0
      %s31 = sadd.s32 %s30, 1
      %s32 = scalar_select %p29, %s30, %s31
      %p35 = pneg %p29
      %p36 = scmp.eq.s32.totalorder %s20, 1
      %p37 = por %p35, %p36
      %p38 = scmp.ne.s32.totalorder %s30, %s33
      %p39 = scmp.eq.s32.totalorder %s20, 0
      %p40 = por %p38, %p39
      %p41 = scmp.ne.s32.totalorder %s30, %s33
      %p42 = scmp.eq.s32.totalorder %s25, 1
      %p43 = por %p41, %p42
      %p44 = scmp.ne.s32.totalorder %s33, %s34
      %p45 = scmp.eq.s32.totalorder %s25, 0
      %p46 = por %p44, %p45
      %p47 = scmp.ne.s32.totalorder %s33, %s34
      %p48 = scmp.eq.s32.totalorder %s26, 1
      %p49 = por %p47, %p48
      %p51 = scmp.ne.s32.totalorder %s34, %s50
      %p52 = scmp.eq.s32.totalorder %s26, 0
      %p53 = por %p51, %p52
      %s55 = sadd.s32 %s54, 1
      %p58 = scmp.eq.s32.totalorder %s20, 1
      %p59 = scmp.ne.s32.totalorder %s54, %s56
      %p60 = scmp.eq.s32.totalorder %s20, 0
      %p61 = por %p59, %p60
      %p62 = scmp.ne.s32.totalorder %s54, %s56
      %p63 = scmp.eq.s32.totalorder %s25, 1
      %p64 = por %p62, %p63
      %p65 = scmp.ne.s32.totalorder %s56, %s57
      %p66 = scmp.eq.s32.totalorder %s25, 0
      %p67 = por %p65, %p66
      %p68 = scmp.ne.s32.totalorder %s56, %s57
      %p69 = scmp.eq.s32.totalorder %s26, 1
      %p70 = por %p68, %p69
      %p72 = scmp.ne.s32.totalorder %s57, %s71
      %p73 = scmp.eq.s32.totalorder %s26, 0
      %p74 = por %p72, %p73
      %s76 = sadd.s32 %s75, 1
      %p79 = scmp.eq.s32.totalorder %s20, 1
      %p80 = scmp.ne.s32.totalorder %s75, %s77
      %p81 = scmp.eq.s32.totalorder %s20, 0
      %p82 = por %p80, %p81
      %p83 = scmp.ne.s32.totalorder %s75, %s77
      %p84 = scmp.eq.s32.totalorder %s25, 1
      %p85 = por %p83, %p84
      %p86 = scmp.ne.s32.totalorder %s77, %s78
      %p87 = scmp.eq.s32.totalorder %s25, 0
      %p88 = por %p86, %p87
      %p89 = scmp.ne.s32.totalorder %s77, %s78
      %p90 = scmp.eq.s32.totalorder %s26, 1
      %p91 = por %p89, %p90
      %p93 = scmp.ne.s32.totalorder %s78, %s92
      %p94 = scmp.eq.s32.totalorder %s26, 0
      %p95 = por %p93, %p94
      %s97 = sadd.s32 %s96, 1
      %p100 = scmp.eq.s32.totalorder %s20, 1
      %p101 = scmp.ne.s32.totalorder %s96, %s98
      %p102 = scmp.eq.s32.totalorder %s20, 0
      %p103 = por %p101, %p102
      %p104 = scmp.ne.s32.totalorder %s96, %s98
      %p105 = scmp.eq.s32.totalorder %s25, 1
      %p106 = por %p104, %p105
      %p107 = scmp.ne.s32.totalorder %s98, %s99
      %p108 = scmp.eq.s32.totalorder %s25, 0
      %p109 = por %p107, %p108
      %p110 = scmp.ne.s32.totalorder %s98, %s99
      %p111 = scmp.eq.s32.totalorder %s26, 1
      %p112 = por %p110, %p111
      %p114 = scmp.ne.s32.totalorder %s99, %s113
      %p115 = scmp.eq.s32.totalorder %s26, 0
      %p116 = por %p114, %p115
      %s118 = sadd.s32 %s117, 1
      %p121 = scmp.eq.s32.totalorder %s20, 1
      %p122 = scmp.ne.s32.totalorder %s117, %s119
      %p123 = scmp.eq.s32.totalorder %s20, 0
      %p124 = por %p122, %p123
      %p125 = scmp.ne.s32.totalorder %s117, %s119
      %p126 = scmp.eq.s32.totalorder %s25, 1
      %p127 = por %p125, %p126
      %p128 = scmp.ne.s32.totalorder %s119, %s120
      %p129 = scmp.eq.s32.totalorder %s25, 0
      %p130 = por %p128, %p129
      %p131 = scmp.ne.s32.totalorder %s119, %s120
      %p132 = scmp.eq.s32.totalorder %s26, 1
      %p133 = por %p131, %p132
      %p135 = scmp.ne.s32.totalorder %s120, %s134
      %p136 = scmp.eq.s32.totalorder %s26, 0
      %p137 = por %p135, %p136
      %s139 = sadd.s32 %s138, 1
      %p142 = scmp.eq.s32.totalorder %s20, 1
      %p143 = scmp.ne.s32.totalorder %s138, %s140
      %p144 = scmp.eq.s32.totalorder %s20, 0
      %p145 = por %p143, %p144
      %p146 = scmp.ne.s32.totalorder %s138, %s140
      %p147 = scmp.eq.s32.totalorder %s25, 1
      %p148 = por %p146, %p147
      %p149 = scmp.ne.s32.totalorder %s140, %s141
      %p150 = scmp.eq.s32.totalorder %s25, 0
      %p151 = por %p149, %p150
      %p152 = scmp.ne.s32.totalorder %s140, %s141
      %p153 = scmp.eq.s32.totalorder %s26, 1
      %p154 = por %p152, %p153
      %p156 = scmp.ne.s32.totalorder %s141, %s155
      %p157 = scmp.eq.s32.totalorder %s26, 0
      %p158 = por %p156, %p157
      %s160 = sadd.s32 %s159, 1
      %p163 = scmp.eq.s32.totalorder %s20, 1
      %p164 = scmp.ne.s32.totalorder %s159, %s161
      %p165 = scmp.eq.s32.totalorder %s20, 0
      %p166 = por %p164, %p165
      %p167 = scmp.ne.s32.totalorder %s159, %s161
      %p168 = scmp.eq.s32.totalorder %s25, 1
      %p169 = por %p167, %p168
      %p170 = scmp.ne.s32.totalorder %s161, %s162
      %p171 = scmp.eq.s32.totalorder %s25, 0
      %p172 = por %p170, %p171
      %p173 = scmp.ne.s32.totalorder %s161, %s162
      %p174 = scmp.eq.s32.totalorder %s26, 1
      %p175 = por %p173, %p174
      %p177 = scmp.ne.s32.totalorder %s162, %s176
      %p178 = scmp.eq.s32.totalorder %s26, 0
      %p179 = por %p177, %p178
      %s180 = ssub.s32 %s20, %s27
      %p181 = scmp.eq.s32.totalorder %s180, 0
      %s183 = sadd.s32 %s182, 1
      %s184 = scalar_select %p181, %s182, %s183
      %p187 = pneg %p181
      %p188 = scmp.eq.s32.totalorder %s20, 1
      %p189 = por %p187, %p188
      %p190 = scmp.ne.s32.totalorder %s182, %s185
      %p191 = scmp.eq.s32.totalorder %s20, 0
      %p192 = por %p190, %p191
      %p193 = scmp.ne.s32.totalorder %s182, %s185
      %p194 = scmp.eq.s32.totalorder %s25, 1
      %p195 = por %p193, %p194
      %p196 = scmp.ne.s32.totalorder %s185, %s186
      %p197 = scmp.eq.s32.totalorder %s25, 0
      %p198 = por %p196, %p197
      %p199 = scmp.ne.s32.totalorder %s185, %s186
      %p200 = scmp.eq.s32.totalorder %s26, 1
      %p201 = por %p199, %p200
      %p203 = scmp.ne.s32.totalorder %s186, %s202
      %p204 = scmp.eq.s32.totalorder %s26, 0
      %p205 = por %p203, %p204
      %p206 = scmp.le.s32.totalorder 1, %s20
      %p207 = scmp.lt.s32.totalorder %s20, 3
      %p208 = pnand %p206, %p207
      %p209 = pneg %p208
      // Predicated region
      $region9: #{tpu_custom_call.1} parent=5 // pred_check
        _
      $region10: #{tpu_custom_call.1} parent=5 // pred_check_branch
        %211 = sbr.rel (%p208) target = $region12
      $region11: #{tpu_custom_call.1} parent=5 // pred_region
        %s212 = ssub.s32 %s20, 1
        // Predicated region
        $region13: #{tpu_custom_call.1} parent=11 // pred_check
          %p213 = pneg %p67
        $region14: #{tpu_custom_call.1} parent=11 // pred_check_branch
          %215 = sbr.rel (%p213) target = $region16
        $region15: #{tpu_custom_call.1} parent=11 // pred_region
          _
        $region16: #{tpu_custom_call.1} parent=11 // pred_fallthru
          _
        // Predicated region
        $region17: #{tpu_custom_call.1} parent=11 // pred_check
          %p216 = pneg %p88
        $region18: #{tpu_custom_call.1} parent=11 // pred_check_branch
          %218 = sbr.rel (%p216) target = $region20
        $region19: #{tpu_custom_call.1} parent=11 // pred_region
          _
        $region20: #{tpu_custom_call.1} parent=11 // pred_fallthru
          _
        // Predicated region
        $region21: #{tpu_custom_call.1} parent=11 // pred_check
          %p219 = pneg %p109
        $region22: #{tpu_custom_call.1} parent=11 // pred_check_branch
          %221 = sbr.rel (%p219) target = $region24
        $region23: #{tpu_custom_call.1} parent=11 // pred_region
          _
        $region24: #{tpu_custom_call.1} parent=11 // pred_fallthru
          _
        // Predicated region
        $region25: #{tpu_custom_call.1} parent=11 // pred_check
          %p222 = pneg %p130
        $region26: #{tpu_custom_call.1} parent=11 // pred_check_branch
          %224 = sbr.rel (%p222) target = $region28
        $region27: #{tpu_custom_call.1} parent=11 // pred_region
          %s226 = ssub.s32 16, 16
          %227 = vsyncadd [#allocation6], %s226
          %s229 = sshll.u32 [#allocation5], 4
          %s230 = int_to_ptr.vmem [resolvable:$true] %s229
          %232 = dma.hbm_to_vmem [thread:$0]  %s4, 16, %s230, [#allocation6]
        $region28: #{tpu_custom_call.1} parent=11 // pred_fallthru
          _
        // Predicated region
        $region29: #{tpu_custom_call.1} parent=11 // pred_check
          %p233 = pneg %p151
        $region30: #{tpu_custom_call.1} parent=11 // pred_check_branch
          %235 = sbr.rel (%p233) target = $region32
        $region31: #{tpu_custom_call.1} parent=11 // pred_region
          _
        $region32: #{tpu_custom_call.1} parent=11 // pred_fallthru
          _
        // Predicated region
        $region33: #{tpu_custom_call.1} parent=11 // pred_check
          %p236 = pneg %p172
        $region34: #{tpu_custom_call.1} parent=11 // pred_check_branch
          %238 = sbr.rel (%p236) target = $region36
        $region35: #{tpu_custom_call.1} parent=11 // pred_region
          _
        $region36: #{tpu_custom_call.1} parent=11 // pred_fallthru
          _
      $region12: #{tpu_custom_call.1} parent=5 // pred_fallthru
        _
      %p239 = scmp.lt.s32.totalorder %s20, 2
      // Predicated region
      $region37: #{tpu_custom_call.1} parent=5 // pred_check
        %p240 = pneg %p239
      $region38: #{tpu_custom_call.1} parent=5 // pred_check_branch
        %242 = sbr.rel (%p240) target = $region40
      $region39: #{tpu_custom_call.1} parent=5 // pred_region
        // Predicated region
        $region41: #{tpu_custom_call.1} parent=39 // pred_check
          %p243 = pneg %p40
        $region42: #{tpu_custom_call.1} parent=39 // pred_check_branch
          %245 = sbr.rel (%p243) target = $region44
        $region43: #{tpu_custom_call.1} parent=39 // pred_region
          %s246 = sand.u32 %s30, 1
          %s247 = scalar_lea.sflag [#allocation3], %s246
          %s248 = sand.u32 %s30, 1
          %s249 = smul.addr %s248, 8
          %s250 = scalar_lea.vmem [#allocation2], %s249
          %s252 = ssub.s32 128, 128
          %253 = vsyncadd %s247, %s252
          %s254 = smul.addr %s20, 128
          %s255 = scalar_lea.hbm %s0, %s254
          %s257 = sshll.u32 %s250, 4
          %s258 = int_to_ptr.vmem [resolvable:$true] %s257
          %260 = dma.hbm_to_vmem [thread:$0]  %s255, 128, %s258, %s247
        $region44: #{tpu_custom_call.1} parent=39 // pred_fallthru
          _
      $region40: #{tpu_custom_call.1} parent=5 // pred_fallthru
        _
      %p261 = scmp.le.s32.totalorder 1, %s20
      %p262 = scmp.lt.s32.totalorder %s20, 3
      %p263 = pnand %p261, %p262
      %p264 = pneg %p263
      // Predicated region
      $region45: #{tpu_custom_call.1} parent=5 // pred_check
        _
      $region46: #{tpu_custom_call.1} parent=5 // pred_check_branch
        %266 = sbr.rel (%p263) target = $region48
      $region47: #{tpu_custom_call.1} parent=5 // pred_region
        %s267 = ssub.s32 %s20, 1
        %s268 = sand.u32 %s33, 1
        %s269 = scalar_lea.sflag [#allocation3], %s268
        %s270 = sand.u32 %s33, 1
        %s271 = smul.addr %s270, 8
        %s272 = scalar_lea.vmem [#allocation2], %s271
        // Predicated region
        $region49: #{tpu_custom_call.1} parent=47 // pred_check
          %p273 = pneg %p46
        $region50: #{tpu_custom_call.1} parent=47 // pred_check_branch
          %275 = sbr.rel (%p273) target = $region52
        $region51: #{tpu_custom_call.1} parent=47 // pred_region
          %276 = dma.done %s269, 128
        $region52: #{tpu_custom_call.1} parent=47 // pred_fallthru
          _
        // Predicated region
        $region53: #{tpu_custom_call.1} parent=47 // pred_check
          %p277 = pneg %p130
        $region54: #{tpu_custom_call.1} parent=47 // pred_check_branch
          %279 = sbr.rel (%p277) target = $region56
        $region55: #{tpu_custom_call.1} parent=47 // pred_region
          %280 = dma.done [#allocation6], 16
        $region56: #{tpu_custom_call.1} parent=47 // pred_fallthru
          _
        %s281 = sand.u32 %s33, 1
        %s282 = scalar_lea.sflag [#allocation3], %s281
        %s283 = sand.u32 %s33, 1
        %s284 = smul.addr %s283, 8
        %s285 = scalar_lea.vmem [#allocation2], %s284
        %p286 = pneg %p46
        %p287 = pneg %p43
        %p288 = pneg %p67
        %p289 = pneg %p64
        %p290 = pneg %p88
        %p291 = pneg %p85
        %p292 = pneg %p109
        %p293 = pneg %p106
        %p294 = pneg %p130
        %p295 = pneg %p127
        %p296 = pneg %p151
        %p297 = pneg %p148
        %p298 = pneg %p172
        %p299 = pneg %p169
        %p300 = pneg %p198
        %p301 = pneg %p195
        %s302 = sand.u32 %s185, 1
        %s303 = scalar_lea.sflag [#allocation4], %s302
        %s304 = sand.u32 %s185, 1
        %s305 = smul.addr %s304, 8
        %s306 = scalar_lea.vmem [#allocation7], %s305
        %v308 = vld [vmem:[%s272] sm:$0xff]
        %v310 = vrot.slane %v308, 7
        %vm312 = vcmask 1040384
        %v313 = vsel %vm312, 0.0, %v310
        %v314 = vrot.slane %v308, 1
        %vm316 = vcmask 1046528
        %v317 = vsel %vm316, %v314, 0.0
        %318 = vrot.lane.b32.xlu0 %v308, 16
        %v319 = vpop.permute.xlu0 %318
        %322 = vrot.lane.b32.xlu0 %v317, 32
        %v323 = vpop.permute.xlu0 %322
        %vm325 = vcmask 130048
        %v326 = vsel %vm325, %v313, %v319
        %vm327 = vcmask 261120
        %v328 = vsel %vm327, %v326, %v323
        %v329 = vpack.c.bf16 %v328, %v328
        %v330 = vld [vmem:[%s1] sm:$0xf]
        %v331 = vld [vmem:[%s1 + $0x4] sm:$0xf]
        %v332 = vld [vmem:[%s1 + $0x8] sm:$0xf]
        %v333 = vld [vmem:[%s1 + $0xc] sm:$0xf]
        %v334 = vld [vmem:[%s1 + $0x10] sm:$0xf]
        %v335 = vld [vmem:[%s1 + $0x14] sm:$0xf]
        %v336 = vld [vmem:[%s2] sm:$0x1]
        %v338 = vlaneseq
        %v339 = vshrl.u32 %v338, 7
        %v340 = vsub.s32 0, %v339
        %v341 = vrot.slane %v336, %v340
        %v349 = vunpack.c.l.b16 %v330
        %v350 = vunpack.c.l.b16 %v331
        %v351 = vunpack.c.l.b16 %v332
        %v352 = vunpack.c.l.b16 %v333
        %v353 = vunpack.c.l.b16 %v334
        %v354 = vunpack.c.l.b16 %v335
        %v355 = vpack.c.b16 %v350, %v349
        %v356 = vpack.c.b16 %v352, %v351
        %v357 = vpack.c.b16 %v354, %v353
        %vm361 = vcmask 392192
        %v363 = vsel %vm361, %v329, 0
        %365 = vmatprep.subr.bf16.mxu0 0
        %366 = vmatpush1.bf16.msra.mxu0 0
        %367 = vmatprep.subr.bf16.mxu0 0
        %368 = vmatpush1.bf16.msra.mxu0 0
        %369 = vmatprep.subr.bf16.mxu0 0
        %370 = vmatpush1.bf16.msra.mxu0 0
        %371 = vmatprep.subr.bf16.mxu0 0
        %372 = vmatpush1.bf16.msra.mxu0 0
        %373 = vmatprep.subr.bf16.mxu0 0
        %374 = vmatpush1.bf16.msra.mxu0 0
        %375 = vmatprep.subr.bf16.mxu0 0
        %376 = vmatpush1.bf16.msra.mxu0 %v357
        %377 = vmatprep.subr.bf16.mxu0 0
        %378 = vmatpush1.bf16.msra.mxu0 %v356
        %379 = vmatprep.subr.bf16.mxu0 0
        %380 = vmatpush1.bf16.msra.mxu0 %v355
        %381 = vmatprep.subr.bf16.mxu0 0
        %382 = vmatpush2.bf16.msra.mxu0 0
        %383 = vmatprep.subr.bf16.mxu0 0
        %384 = vmatpush2.bf16.msra.mxu0 0
        %385 = vmatprep.subr.bf16.mxu0 0
        %386 = vmatpush2.bf16.msra.mxu0 0
        %387 = vmatprep.subr.bf16.mxu0 0
        %388 = vmatpush2.bf16.msra.mxu0 0
        %389 = vmatprep.subr.bf16.mxu0 0
        %390 = vmatpush2.bf16.msra.mxu0 0
        %391 = vmatprep.subr.bf16.mxu0 0
        %392 = vmatpush2.bf16.msra.mxu0 0
        %393 = vmatprep.subr.bf16.mxu0 0
        %394 = vmatpush2.bf16.msra.mxu0 0
        %395 = vmatprep.subr.bf16.mxu0 0
        %396 = vmatpush2.bf16.msra.mxu0 0
        %397 = vmatprep.mubr.bf16.mxu0 0
        %398 = vmatmul.mubr.bf16.gmra.mxu0 %v363
        %v399 = vpop.f32.mrf.mxu0
        %v400 = vadd.f32 %v341, %v399
        %v401 = vpop.f32.mrf.mxu0
        %v402 = vpop.f32.mrf.mxu0
        %v403 = vpop.f32.mrf.mxu0
        %404 = vdwg.mxu0
        %vm405 = vcmp.gt.f32.partialorder %v400, 0.0
        %v406 = vmul.f32 %v400, 0.2
        %v407 = vsel %vm405, %v400, %v406
        %v409 = vrot.slane %v407, 7
        %410 = vrot.lane.b32.xlu0 %v409, 96
        %v411 = vpop.permute.xlu0 %410
        %v413 = vsel %vm312, 0.0, %v411
        %414 = vrot.lane.b32.xlu0 %v407, 32
        %v415 = vpop.permute.xlu0 %414
        %v417 = vsel %vm327, %v413, %v415
        %vm418 = vcmask 523264
        %v419 = vsel %vm418, %v417, %v415
        %v420 = vrot.slane %v407, 1
        %v422 = vsel %vm316, %v420, 0.0
        %424 = vrot.lane.b32.xlu0 %v422, 64
        %v425 = vpop.permute.xlu0 %424
        %v427 = vsel %vm418, %v407, %v425
        %v428 = vpack.c.bf16 %v427, %v419
        %v429 = vld [vmem:[%s3] sm:$0xf]
        %v430 = vld [vmem:[%s3 + $0x4] sm:$0xf]
        %v431 = vld [vmem:[%s3 + $0x8] sm:$0xf]
        %v432 = vld [vmem:[%s3 + $0xc] sm:$0xf]
        %v433 = vld [vmem:[%s3 + $0x10] sm:$0xf]
        %v434 = vld [vmem:[%s3 + $0x14] sm:$0xf]
        %v435 = vld [vmem:[%s3 + $0x18] sm:$0xf]
        %v436 = vld [vmem:[%s3 + $0x1c] sm:$0xf]
        %v437 = vld [vmem:[%s3 + $0x20] sm:$0xf]
        %v438 = vld [vmem:[%s3 + $0x24] sm:$0xf]
        %v439 = vld [vmem:[%s3 + $0x28] sm:$0xf]
        %v440 = vld [vmem:[%s3 + $0x2c] sm:$0xf]
        %v441 = vld [vmem:[#allocation5] sm:$0x1]
        %v443 = vlaneseq
        %v444 = vshrl.u32 %v443, 7
        %v445 = vsub.s32 0, %v444
        %v446 = vrot.slane %v441, %v445
        %v460 = vunpack.c.l.b16 %v429
        %v461 = vunpack.c.l.b16 %v430
        %v462 = vunpack.c.l.b16 %v431
        %v463 = vunpack.c.l.b16 %v432
        %v464 = vunpack.c.l.b16 %v433
        %v465 = vunpack.c.l.b16 %v434
        %v466 = vunpack.c.l.b16 %v435
        %v467 = vunpack.c.l.b16 %v436
        %v468 = vunpack.c.l.b16 %v437
        %v469 = vunpack.c.l.b16 %v438
        %v470 = vunpack.c.l.b16 %v439
        %v471 = vunpack.c.l.b16 %v440
        %v472 = vpack.c.b16 %v461, %v460
        %v473 = vpack.c.b16 %v463, %v462
        %v474 = vpack.c.b16 %v465, %v464
        %v475 = vpack.c.b16 %v467, %v466
        %v476 = vpack.c.b16 %v469, %v468
        %v477 = vpack.c.b16 %v471, %v470
        %vm484 = vcmask 785408
        %v486 = vsel %vm484, %v428, 0
        %488 = vmatprep.subr.bf16.mxu0 0
        %489 = vmatpush1.bf16.msra.mxu0 0
        %490 = vmatprep.subr.bf16.mxu0 0
        %491 = vmatpush1.bf16.msra.mxu0 0
        %492 = vmatprep.subr.bf16.mxu0 0
        %493 = vmatpush1.bf16.msra.mxu0 %v477
        %494 = vmatprep.subr.bf16.mxu0 0
        %495 = vmatpush1.bf16.msra.mxu0 %v476
        %496 = vmatprep.subr.bf16.mxu0 0
        %497 = vmatpush1.bf16.msra.mxu0 %v475
        %498 = vmatprep.subr.bf16.mxu0 0
        %499 = vmatpush1.bf16.msra.mxu0 %v474
        %500 = vmatprep.subr.bf16.mxu0 0
        %501 = vmatpush1.bf16.msra.mxu0 %v473
        %502 = vmatprep.subr.bf16.mxu0 0
        %503 = vmatpush1.bf16.msra.mxu0 %v472
        %504 = vmatprep.subr.bf16.mxu0 0
        %505 = vmatpush2.bf16.msra.mxu0 0
        %506 = vmatprep.subr.bf16.mxu0 0
        %507 = vmatpush2.bf16.msra.mxu0 0
        %508 = vmatprep.subr.bf16.mxu0 0
        %509 = vmatpush2.bf16.msra.mxu0 0
        %510 = vmatprep.subr.bf16.mxu0 0
        %511 = vmatpush2.bf16.msra.mxu0 0
        %512 = vmatprep.subr.bf16.mxu0 0
        %513 = vmatpush2.bf16.msra.mxu0 0
        %514 = vmatprep.subr.bf16.mxu0 0
        %515 = vmatpush2.bf16.msra.mxu0 0
        %516 = vmatprep.subr.bf16.mxu0 0
        %517 = vmatpush2.bf16.msra.mxu0 0
        %518 = vmatprep.subr.bf16.mxu0 0
        %519 = vmatpush2.bf16.msra.mxu0 0
        %520 = vmatprep.mubr.bf16.mxu0 0
        %521 = vmatmul.mubr.bf16.gmra.mxu0 %v486
        %v522 = vpop.f32.mrf.mxu0
        %v523 = vadd.f32 %v446, %v522
        %v524 = vpop.f32.mrf.mxu0
        %v525 = vpop.f32.mrf.mxu0
        %v526 = vadd.f32 %v446, %v525
        %v527 = vpop.f32.mrf.mxu0
        %528 = vdwg.mxu0
        %vm529 = vcmp.gt.f32.partialorder %v523, 0.0
        %vm530 = vcmp.gt.f32.partialorder %v526, 0.0
        %v531 = vmul.f32 %v523, 0.2
        %v532 = vmul.f32 %v526, 0.2
        %v533 = vsel %vm529, %v523, %v531
        %v534 = vsel %vm530, %v526, %v532
        %536 = vrot.lane.b32.xlu0 %v534, 64
        %v537 = vpop.permute.xlu0 %536
        %v539 = vsel %vm418, %v533, %v537
        %v540 = vpack.c.bf16 %v539, %v539
        %v541 = vld [vmem:[%s5] sm:$0xf]
        %v542 = vld [vmem:[%s5 + $0x4] sm:$0xf]
        %v543 = vld [vmem:[%s5 + $0x8] sm:$0xf]
        %v544 = vld [vmem:[%s5 + $0xc] sm:$0xf]
        %v545 = vld [vmem:[%s5 + $0x10] sm:$0xf]
        %v546 = vld [vmem:[%s5 + $0x14] sm:$0xf]
        %v547 = vld [vmem:[%s5 + $0x18] sm:$0xf]
        %v548 = vld [vmem:[%s5 + $0x1c] sm:$0xf]
        %v549 = vld [vmem:[%s5 + $0x20] sm:$0xf]
        %v550 = vld [vmem:[%s5 + $0x24] sm:$0xf]
        %v551 = vld [vmem:[%s5 + $0x28] sm:$0xf]
        %v552 = vld [vmem:[%s5 + $0x2c] sm:$0xf]
        %v553 = vld [vmem:[%s5 + $0x30] sm:$0xf]
        %v554 = vld [vmem:[%s5 + $0x34] sm:$0xf]
        %v555 = vld [vmem:[%s5 + $0x38] sm:$0xf]
        %v556 = vld [vmem:[%s5 + $0x3c] sm:$0xf]
        %v557 = vld [vmem:[%s6] sm:$0x1]
        %v559 = vlaneseq
        %v560 = vshrl.u32 %v559, 7
        %v561 = vsub.s32 0, %v560
        %v562 = vrot.slane %v557, %v561
        %v580 = vunpack.c.l.b16 %v541
        %v581 = vunpack.c.l.b16 %v542
        %v582 = vunpack.c.l.b16 %v543
        %v583 = vunpack.c.l.b16 %v544
        %v584 = vunpack.c.l.b16 %v545
        %v585 = vunpack.c.l.b16 %v546
        %v586 = vunpack.c.l.b16 %v547
        %v587 = vunpack.c.l.b16 %v548
        %v588 = vunpack.c.l.b16 %v549
        %v589 = vunpack.c.l.b16 %v550
        %v590 = vunpack.c.l.b16 %v551
        %v591 = vunpack.c.l.b16 %v552
        %v592 = vunpack.c.l.b16 %v553
        %v593 = vunpack.c.l.b16 %v554
        %v594 = vunpack.c.l.b16 %v555
        %v595 = vunpack.c.l.b16 %v556
        %v596 = vpack.c.b16 %v581, %v580
        %v597 = vpack.c.b16 %v583, %v582
        %v598 = vpack.c.b16 %v585, %v584
        %v599 = vpack.c.b16 %v587, %v586
        %v600 = vpack.c.b16 %v589, %v588
        %v601 = vpack.c.b16 %v591, %v590
        %v602 = vpack.c.b16 %v593, %v592
        %v603 = vpack.c.b16 %v595, %v594
        %612 = vmatprep.subr.bf16.mxu0 0
        %613 = vmatpush1.bf16.msra.mxu0 %v603
        %614 = vmatprep.subr.bf16.mxu0 0
        %615 = vmatpush1.bf16.msra.mxu0 %v602
        %616 = vmatprep.subr.bf16.mxu0 0
        %617 = vmatpush1.bf16.msra.mxu0 %v601
        %618 = vmatprep.subr.bf16.mxu0 0
        %619 = vmatpush1.bf16.msra.mxu0 %v600
        %620 = vmatprep.subr.bf16.mxu0 0
        %621 = vmatpush1.bf16.msra.mxu0 %v599
        %622 = vmatprep.subr.bf16.mxu0 0
        %623 = vmatpush1.bf16.msra.mxu0 %v598
        %624 = vmatprep.subr.bf16.mxu0 0
        %625 = vmatpush1.bf16.msra.mxu0 %v597
        %626 = vmatprep.subr.bf16.mxu0 0
        %627 = vmatpush1.bf16.msra.mxu0 %v596
        %628 = vmatprep.subr.bf16.mxu0 0
        %629 = vmatpush2.bf16.msra.mxu0 0
        %630 = vmatprep.subr.bf16.mxu0 0
        %631 = vmatpush2.bf16.msra.mxu0 0
        %632 = vmatprep.subr.bf16.mxu0 0
        %633 = vmatpush2.bf16.msra.mxu0 0
        %634 = vmatprep.subr.bf16.mxu0 0
        %635 = vmatpush2.bf16.msra.mxu0 0
        %636 = vmatprep.subr.bf16.mxu0 0
        %637 = vmatpush2.bf16.msra.mxu0 0
        %638 = vmatprep.subr.bf16.mxu0 0
        %639 = vmatpush2.bf16.msra.mxu0 0
        %640 = vmatprep.subr.bf16.mxu0 0
        %641 = vmatpush2.bf16.msra.mxu0 0
        %642 = vmatprep.subr.bf16.mxu0 0
        %643 = vmatpush2.bf16.msra.mxu0 0
        %644 = vmatprep.mubr.bf16.mxu0 0
        %645 = vmatmul.mubr.bf16.gmra.mxu0 %v540
        %v646 = vpop.f32.mrf.mxu0
        %v647 = vadd.f32 %v562, %v646
        %v648 = vpop.f32.mrf.mxu0
        %v649 = vpop.f32.mrf.mxu0
        %v650 = vpop.f32.mrf.mxu0
        %651 = vdwg.mxu0
        %652 = vst [vmem:[%s306] sm:$0xff] %v647
        %s653 = sand.u32 %s185, 1
        %s654 = scalar_lea.sflag [#allocation4], %s653
        %s655 = sand.u32 %s185, 1
        %s656 = smul.addr %s655, 8
        %s657 = scalar_lea.vmem [#allocation7], %s656
        // Predicated region
        $region57: #{tpu_custom_call.1} parent=47 // pred_check
          %p658 = pneg %p195
        $region58: #{tpu_custom_call.1} parent=47 // pred_check_branch
          %660 = sbr.rel (%p658) target = $region60
        $region59: #{tpu_custom_call.1} parent=47 // pred_region
          %s662 = ssub.s32 128, 128
          %663 = vsyncadd %s654, %s662
          %s664 = smul.addr %s25, 128
          %s665 = scalar_lea.hbm %s7, %s664
          %s667 = sshll.u32 %s657, 4
          %s668 = int_to_ptr.vmem [resolvable:$true] %s667
          %670 = dma.vmem_to_hbm [thread:$0]  %s668, 128, %s665, %s654
        $region60: #{tpu_custom_call.1} parent=47 // pred_fallthru
          _
      $region48: #{tpu_custom_call.1} parent=5 // pred_fallthru
        _
      %p671 = scmp.le.s32.totalorder 2, %s20
      // Predicated region
      $region61: #{tpu_custom_call.1} parent=5 // pred_check
        %p672 = pneg %p671
      $region62: #{tpu_custom_call.1} parent=5 // pred_check_branch
        %674 = sbr.rel (%p672) target = $region64
      $region63: #{tpu_custom_call.1} parent=5 // pred_region
        %s675 = ssub.s32 %s20, 2
        // Predicated region
        $region65: #{tpu_custom_call.1} parent=63 // pred_check
          %p676 = pneg %p201
        $region66: #{tpu_custom_call.1} parent=63 // pred_check_branch
          %678 = sbr.rel (%p676) target = $region68
        $region67: #{tpu_custom_call.1} parent=63 // pred_region
          %s679 = sand.u32 %s186, 1
          %s680 = scalar_lea.sflag [#allocation4], %s679
          %s681 = sand.u32 %s186, 1
          %s682 = smul.addr %s681, 8
          %s683 = scalar_lea.vmem [#allocation7], %s682
          %684 = dma.done %s680, 128
        $region68: #{tpu_custom_call.1} parent=63 // pred_fallthru
          _
      $region64: #{tpu_custom_call.1} parent=5 // pred_fallthru
        _
    $region6: #{tpu_custom_call.1} parent=1 // loop_footer
      %s24 = sadd.s32 1, %s20
    $region7: #{tpu_custom_call.1} parent=1 // loop_footer_branch
      %19 = sbr.rel target = $region3
    $region8: #{tpu_custom_call.1} parent=1 // loop_exit
      _
    %685 = vsyncpa [#allocation3], 1
    %s686 = scalar_lea.sflag [#allocation3], 1
    %687 = vsyncpa %s686, 1
    %688 = vsyncpa [#allocation6], 1
    %689 = vsyncpa [#allocation4], 1
    %s690 = scalar_lea.sflag [#allocation4], 1
    %691 = vsyncpa %s690, 1

</llo_original>
